<compile_context>
chip_gen: v6e
topology: v6e:2x2x1
jax: 0.10.0
libtpu: 0.0.40
codegen_flags: <defaults>
</compile_context>

<pallas_src>
import math
from functools import partial

import jax
import jax.numpy as jnp
from jax.experimental import pallas as pl
from jax.experimental.pallas import tpu as pltpu


def _round_up(x, m):
    return ((x + m - 1) // m) * m


def _conv1d_kernel(x_ref, w_ref, b_ref, o_ref, *, kernel_size, stride,
                   dilation, tile_l):
    # x_ref: (1, 1, TILE_LIN, C_in_p)  halo-included input tile (native dtype)
    # w_ref: (K*C_in_p, C_out_p)       folded weight (native dtype)
    # b_ref: (1, C_out_p)              f32 bias
    # o_ref: (1, TILE_L, C_out_p)
    if stride == 1:
        xt = x_ref[0, 0]                                    # (TILE_LIN, C_in_p)
        taps = [xt[k * dilation:k * dilation + tile_l, :]
                for k in range(kernel_size)]
    else:
        taps = [x_ref[0, 0, pl.ds(k * dilation, tile_l, stride=stride), :]
                for k in range(kernel_size)]
    lhs = taps[0] if kernel_size == 1 else jnp.concatenate(taps, axis=-1)
    # Single MXU matmul, contraction = K * C_in_p, f32 accumulation.
    acc = jnp.dot(lhs, w_ref[...], preferred_element_type=jnp.float32)
    acc = acc + b_ref[...]                                  # (1, C_out_p) broadcasts
    o_ref[0] = acc.astype(o_ref.dtype)


def _pick_tile_l(c_in_p, c_out_p, k, stride, dilation, itemsize,
                 budget_bytes=12 * 1024 * 1024):
    """Largest power-of-two L tile whose double-buffered working set fits."""
    w_bytes = k * c_in_p * c_out_p * itemsize
    for cand in (2048, 1024, 512, 256, 128, 64, 32, 16, 8):
        tile_lin = _round_up((cand - 1) * stride + (k - 1) * dilation + 1, 8)
        work = 2 * (tile_lin * c_in_p * itemsize + cand * c_out_p * itemsize)
        work += 2 * (w_bytes + c_out_p * 4)
        work += cand * (k * c_in_p + c_out_p) * 4           # in-kernel lhs + f32 acc
        if work <= budget_bytes:
            return cand
    return 8


def conv1d_pallas(x_ncl, weight, bias, *, stride=1, padding=0, dilation=1,
                  tile_l=None):
    """x_ncl: (B, C_in, L); weight: (C_out, C_in, K); bias: (C_out,).
    Returns (B, C_out, L_out) matching torch.nn.functional.conv1d."""
    B, C_in, L = x_ncl.shape
    C_out, _, K = weight.shape
    L_out = (L + 2 * padding - dilation * (K - 1) - 1) // stride + 1
    dtype = x_ncl.dtype
    itemsize = jnp.dtype(dtype).itemsize

    # Lane-dense channel padding.
    C_in_p = _round_up(C_in, 128)
    C_out_p = _round_up(C_out, 128)

    # L tiling (tile_l is a multiple of 8; working set budgeted for all gens).
    if tile_l is None:
        tile_l = _pick_tile_l(C_in_p, C_out_p, K, stride, dilation, itemsize)
    tile_l = min(tile_l, _round_up(L_out, 8))
    tile_l = _round_up(tile_l, 8)
    num_tiles = pl.cdiv(L_out, tile_l)
    L_out_grid = num_tiles * tile_l

    # Per-tile input window length (includes (K-1)*dilation halo), sublane-aligned.
    tile_lin = _round_up((tile_l - 1) * stride + (K - 1) * dilation + 1, 8)
    # Total padded input length so every tile's window is in-bounds.
    L_in_total = max(L + 2 * padding, (num_tiles - 1) * tile_l * stride + tile_lin)

    # NCL -> NLC, zero-pad length (conv padding + tail) and channels.
    x_nlc = jnp.transpose(x_ncl, (0, 2, 1))                          # (B, L, C_in)
    x_nlc = jnp.pad(
        x_nlc,
        ((0, 0), (padding, L_in_total - L - padding), (0, C_in_p - C_in)))

    # Re-block into halo-carrying L tiles: (B, num_tiles, tile_lin, C_in_p).
    starts = jnp.arange(num_tiles, dtype=jnp.int32) * (tile_l * stride)
    win = starts[:, None] + jnp.arange(tile_lin, dtype=jnp.int32)[None, :]
    x_blk = x_nlc[:, win, :]

    # Fold weight: (C_out, C_in, K) -> (K, C_in_p, C_out_p) -> (K*C_in_p, C_out_p).
    w = jnp.transpose(weight, (2, 1, 0))
    w = jnp.pad(w, ((0, 0), (0, C_in_p - C_in), (0, C_out_p - C_out)))
    w_folded = w.reshape(K * C_in_p, C_out_p).astype(dtype)
    b2 = jnp.pad(bias.astype(jnp.float32), (0, C_out_p - C_out)).reshape(1, C_out_p)

    kern = partial(_conv1d_kernel, kernel_size=K, stride=stride,
                   dilation=dilation, tile_l=tile_l)

    flops = 2 * B * L_out * C_out * K * C_in
    bytes_accessed = (x_blk.size * itemsize + w_folded.size * itemsize
                      + b2.size * 4 + B * L_out_grid * C_out_p * itemsize)

    out_full = pl.pallas_call(
        kern,
        out_shape=jax.ShapeDtypeStruct((B, L_out_grid, C_out_p), dtype),
        grid=(B, num_tiles),
        in_specs=[
            pl.BlockSpec((1, 1, tile_lin, C_in_p), lambda b, j: (b, j, 0, 0)),
            pl.BlockSpec((K * C_in_p, C_out_p), lambda b, j: (0, 0)),
            pl.BlockSpec((1, C_out_p), lambda b, j: (0, 0)),
        ],
        out_specs=pl.BlockSpec((1, tile_l, C_out_p), lambda b, j: (b, j, 0)),
        compiler_params=pltpu.CompilerParams(
            dimension_semantics=("parallel", "parallel"),
            vmem_limit_bytes=32 * 1024 * 1024),
        cost_estimate=pl.CostEstimate(flops=int(flops), transcendentals=0,
                                      bytes_accessed=int(bytes_accessed)),
    )(x_blk, w_folded, b2)

    # Strip L / channel padding, back to NCL.
    out = out_full[:, :L_out, :C_out]
    return jnp.transpose(out, (0, 2, 1))


def init_conv1d_params(key, in_channels, out_channels, kernel_size,
                       w_init_gain="linear"):
    """Matches nn.Conv1d param shapes + xavier_uniform_(gain=calc_gain('linear'))."""
    kw, kb = jax.random.split(key)
    gain = 1.0  # nn.init.calculate_gain('linear') == 1.0
    fan_in = in_channels * kernel_size
    fan_out = out_channels * kernel_size
    a = gain * math.sqrt(6.0 / (fan_in + fan_out))
    weight = jax.random.uniform(kw, (out_channels, in_channels, kernel_size),
                                jnp.float32, -a, a)
    # PyTorch default bias init: U(-1/sqrt(fan_in), 1/sqrt(fan_in))
    bound = 1.0 / math.sqrt(fan_in)
    bias = jax.random.uniform(kb, (out_channels,), jnp.float32, -bound, bound)
    return weight, bias


if __name__ == "__main__":
    key = jax.random.PRNGKey(0)
    k_x, k_p = jax.random.split(key)

    # Small shapes consistent with Conv1d forward: x is (B, C_in, L).
    B, C_in, L = 2, 4, 16
    C_out, K = 8, 3
    stride, padding, dilation = 1, 1, 1

    x = jax.random.normal(k_x, (B, C_in, L), jnp.float32)
    weight, bias = init_conv1d_params(k_p, C_in, C_out, K, w_init_gain="linear")

    out = conv1d_pallas(x, weight, bias, stride=stride, padding=padding,
                        dilation=dilation)
    out = jax.block_until_ready(out)

    # Pure-JAX reference (same semantics as torch.nn.functional.conv1d).
    ref = jax.lax.conv_general_dilated(
        x, weight, window_strides=(stride,), padding=[(padding, padding)],
        rhs_dilation=(dilation,), dimension_numbers=("NCH", "OIH", "NCH"),
    ) + bias[None, :, None]

    L_out = (L + 2 * padding - dilation * (K - 1) - 1) // stride + 1
    assert out.shape == ref.shape == (B, C_out, L_out)
    assert jnp.allclose(out, ref, atol=1e-4, rtol=1e-4), "mismatch vs reference"

    print("KERNEL_OK")
</pallas_src>

<mosaic_0001>
module attributes {stable_mosaic.version = 11 : i64} {
  func.func @_conv1d_kernel(%arg0: i32, %arg1: i32, %arg2: memref<1x1x24x128xf32, #tpu.memory_space<vmem>>, %arg3: memref<384x128xf32, #tpu.memory_space<vmem>>, %arg4: memref<1x128xf32, #tpu.memory_space<vmem>>, %arg5: memref<1x16x128xf32, #tpu.memory_space<vmem>>) attributes {dimension_semantics = [#tpu.dimension_semantics<parallel>, #tpu.dimension_semantics<parallel>], iteration_bounds = array<i64: 2, 1>, scalar_prefetch = 0 : i64, scratch_operands = 0 : i64, tpu.core_type = #tpu.core_type<tc>, window_params = [{transform_indices = @transform_0, window_bounds = array<i64: 1, 1, 24, 128>}, {pipeline_mode = #tpu.pipeline_mode<synchronous>, transform_indices = @transform_1, window_bounds = array<i64: 384, 128>}, {pipeline_mode = #tpu.pipeline_mode<synchronous>, transform_indices = @transform_2, window_bounds = array<i64: 1, 128>}, {transform_indices = @transform_3, window_bounds = array<i64: 1, 16, 128>}]} {
    %c0 = arith.constant 0 : index
    %c0_0 = arith.constant 0 : index
    %c0_1 = arith.constant 0 : index
    %c0_2 = arith.constant 0 : index
    %0 = vector.load %arg2[%c0, %c0_0, %c0_1, %c0_2] : memref<1x1x24x128xf32, #tpu.memory_space<vmem>>, vector<1x1x24x128xf32>
    %1 = vector.shape_cast %0 : vector<1x1x24x128xf32> to vector<24x128xf32>
    %2 = vector.extract_strided_slice %1 {offsets = [0, 0], sizes = [16, 128], strides = [1, 1]} : vector<24x128xf32> to vector<16x128xf32>
    %3 = vector.extract_strided_slice %1 {offsets = [1, 0], sizes = [16, 128], strides = [1, 1]} : vector<24x128xf32> to vector<16x128xf32>
    %4 = vector.extract_strided_slice %1 {offsets = [2, 0], sizes = [16, 128], strides = [1, 1]} : vector<24x128xf32> to vector<16x128xf32>
    %5 = tpu.concatenate %2, %3, %4 in 1 : vector<16x128xf32>, vector<16x128xf32>, vector<16x128xf32> -> vector<16x384xf32>
    %c0_3 = arith.constant 0 : index
    %c0_4 = arith.constant 0 : index
    %6 = vector.load %arg3[%c0_3, %c0_4] : memref<384x128xf32, #tpu.memory_space<vmem>>, vector<384x128xf32>
    %cst = arith.constant dense<0.000000e+00> : vector<16x128xf32>
    %7 = tpu.matmul %5, %6, %cst {dimension_numbers = #tpu.dot_dimension_numbers<[1], [0], [0], [1], [0, 0, 1, 1], [], []>} : vector<16x384xf32>, vector<384x128xf32>, vector<16x128xf32> -> vector<16x128xf32>
    %c0_5 = arith.constant 0 : index
    %c0_6 = arith.constant 0 : index
    %8 = vector.load %arg4[%c0_5, %c0_6] : memref<1x128xf32, #tpu.memory_space<vmem>>, vector<1x128xf32>
    %9 = vector.broadcast %8 : vector<1x128xf32> to vector<16x128xf32>
    %10 = arith.addf %7, %9 : vector<16x128xf32>
    %c0_7 = arith.constant 0 : index
    %c0_8 = arith.constant 0 : index
    %c0_9 = arith.constant 0 : index
    %11 = vector.load %arg5[%c0_7, %c0_8, %c0_9] : memref<1x16x128xf32, #tpu.memory_space<vmem>>, vector<1x16x128xf32>
    %12 = vector.shape_cast %11 : vector<1x16x128xf32> to vector<16x128xf32>
    %13 = vector.shape_cast %10 : vector<16x128xf32> to vector<1x16x128xf32>
    tpu.vector_store %arg5[%c0_7, %c0_8, %c0_9], %13 {strides = array<i32>} : memref<1x16x128xf32, #tpu.memory_space<vmem>>, vector<1x16x128xf32>,
    return
  }
  func.func @transform_0(%arg0: i32, %arg1: i32) -> (i32, i32, i32, i32) {
    %c0_i32 = arith.constant 0 : i32
    %c0_i32_0 = arith.constant 0 : i32
    %c0_i32_1 = arith.constant 0 : i32
    return %arg0, %arg1, %c0_i32, %c0_i32_0 : i32, i32, i32, i32
  }
  func.func @transform_1(%arg0: i32, %arg1: i32) -> (i32, i32) {
    %c0_i32 = arith.constant 0 : i32
    %c0_i32_0 = arith.constant 0 : i32
    %c0_i32_1 = arith.constant 0 : i32
    return %c0_i32, %c0_i32_0 : i32, i32
  }
  func.func @transform_2(%arg0: i32, %arg1: i32) -> (i32, i32) {
    %c0_i32 = arith.constant 0 : i32
    %c0_i32_0 = arith.constant 0 : i32
    %c0_i32_1 = arith.constant 0 : i32
    return %c0_i32, %c0_i32_0 : i32, i32
  }
  func.func @transform_3(%arg0: i32, %arg1: i32) -> (i32, i32, i32) {
    %c0_i32 = arith.constant 0 : i32
    %c0_i32_0 = arith.constant 0 : i32
    return %arg0, %arg1, %c0_i32 : i32, i32, i32
  }
}

</mosaic_0001>

<llo_original>
// kernel: tpu_custom_call.1
$region0: #{tpu_custom_call.1}
  #allocation0 [shape = 'u32[]', space=smem, size = 0x4, offset = 0x4, fixed_abs, tag = 'smem constant byte address 0x4 - core index']
  #allocation1 [shape = 'u32[144,128]{1,0:T(1,128)}', space=vmem, size = 0x12000, scoped, tag = 'internal scratch']
  %s0 = inlined_call_operand.hbm [shape: f32[2,1,24,128], index: 0, kind: input, shape index: {}]
  %s1 = inlined_call_operand.hbm [shape: f32[384,128], index: 1, kind: input, shape index: {}]
  %s2 = inlined_call_operand.vmem [shape: f32[1,128], index: 2, kind: input, shape index: {}]
  %s3 = inlined_call_operand.hbm [shape: f32[2,16,128], index: 3, kind: output, shape index: {}]
  %s4 = sld [smem:[#allocation0]]
  $region53: #{tpu_custom_call.1} parent=0
    _
  %s6 = ssub.s32 1, %s4
  %s7 = scalar_select 0, %s6, %s4
  $region1: #{tpu_custom_call.1} parent=0
    #allocation2 [shape = 'u8[24576]{0}', space=vmem, size = 0x6000, scoped, tag = 'input window, operand 0']
    #allocation3 [shape = 's32[2]{0}', space=sflag, size = 0x8, scoped, tag = 'scoped memory for tpu_custom_call.1']
    #allocation4 [shape = 's32[2]{0}', space=sflag, size = 0x8, scoped, tag = 'scoped memory for tpu_custom_call.1']
    #allocation5 [shape = 'u8[196608]{0}', space=vmem, size = 0x30000, scoped, tag = 'input window, operand 1, single buffered']
    #allocation6 [shape = 's32[1]{0}', space=sflag, size = 0x4, scoped, tag = 'scoped memory for tpu_custom_call.1']
    #allocation7 [shape = 'u8[16384]{0}', space=vmem, size = 0x4000, scoped, tag = 'output window, operand 0']
    %8 = vsyncpa [#allocation3], 0
    %s9 = scalar_lea.sflag [#allocation3], 1
    %10 = vsyncpa %s9, 0
    %11 = vsyncpa [#allocation6], 0
    %12 = vsyncpa [#allocation4], 0
    %s13 = scalar_lea.sflag [#allocation4], 1
    %14 = vsyncpa %s13, 0
    loop: start=0, step=1, limit=4
    $region2: #{tpu_custom_call.1} parent=1 // loop_pre_header
      _
    $region3: #{tpu_custom_call.1} parent=1 // loop_header
      %s16 = sphi 0, %s20
      %p17 = scmp.ge.s32.totalorder %s16, 4
      %s23 = sphi 0, %s35
      %s24 = sphi 0, %s31
      %s25 = sphi 0, %s23
      %s26 = sphi 0, %s24
      %s27 = sphi 0, %s25
      %s28 = sphi 0, %s26
      %s40 = sphi 0, %s42
      %s43 = sphi 0, %s40
      %s44 = sphi 0, %s43
      %s60 = sphi 0, %s44
      %s64 = sphi 0, %s64
      %s66 = sphi 0, %s64
      %s67 = sphi 0, %s66
      %s81 = sphi 0, %s67
      %s85 = sphi 0, %s85
      %s87 = sphi 0, %s85
      %s88 = sphi 0, %s87
      %s102 = sphi 0, %s88
      %s110 = sphi 0, %s112
      %s113 = sphi 0, %s110
      %s114 = sphi 0, %s113
      %s130 = sphi 0, %s114
    $region4: #{tpu_custom_call.1} parent=1 // loop_header_branch
      %19 = sbr.rel (%p17) target = $region8
    $region5: #{tpu_custom_call.1} parent=1 // loop_body
      %s21 = ssub.s32 %s16, 1
      %s22 = ssub.s32 %s16, 2
      %s29 = sadd.s32 1, %s24
      %p30 = scmp.ge.s32.totalorder %s29, 1
      %s31 = scalar_select %p30, 0, %s29
      %s32 = sadd.s32 1, %s23
      %s33 = scalar_select %p30, %s32, %s23
      %p34 = scmp.ge.s32.totalorder %s33, 2
      %s35 = scalar_select %p34, 0, %s33
      %s36 = ssub.s32 %s23, %s35
      %s37 = ssub.s32 %s24, %s31
      %s38 = sor.u32 %s36, %s37
      %p39 = scmp.eq.s32.totalorder %s38, 0
      %s41 = sadd.s32 %s40, 1
      %s42 = scalar_select %p39, %s40, %s41
      %p45 = pneg %p39
      %p46 = scmp.eq.s32.totalorder %s16, 1
      %p47 = por %p45, %p46
      %p48 = scmp.ne.s32.totalorder %s40, %s43
      %p49 = scmp.eq.s32.totalorder %s16, 0
      %p50 = por %p48, %p49
      %p51 = scmp.ne.s32.totalorder %s40, %s43
      %p52 = scmp.eq.s32.totalorder %s21, 1
      %p53 = por %p51, %p52
      %p54 = scmp.ne.s32.totalorder %s43, %s44
      %p55 = scmp.eq.s32.totalorder %s21, 0
      %p56 = por %p54, %p55
      %p57 = scmp.ne.s32.totalorder %s43, %s44
      %p58 = scmp.eq.s32.totalorder %s22, 1
      %p59 = por %p57, %p58
      %p61 = scmp.ne.s32.totalorder %s44, %s60
      %p62 = scmp.eq.s32.totalorder %s22, 0
      %p63 = por %p61, %p62
      %s65 = sadd.s32 %s64, 1
      %p68 = scmp.eq.s32.totalorder %s16, 1
      %p69 = scmp.ne.s32.totalorder %s64, %s66
      %p70 = scmp.eq.s32.totalorder %s16, 0
      %p71 = por %p69, %p70
      %p72 = scmp.ne.s32.totalorder %s64, %s66
      %p73 = scmp.eq.s32.totalorder %s21, 1
      %p74 = por %p72, %p73
      %p75 = scmp.ne.s32.totalorder %s66, %s67
      %p76 = scmp.eq.s32.totalorder %s21, 0
      %p77 = por %p75, %p76
      %p78 = scmp.ne.s32.totalorder %s66, %s67
      %p79 = scmp.eq.s32.totalorder %s22, 1
      %p80 = por %p78, %p79
      %p82 = scmp.ne.s32.totalorder %s67, %s81
      %p83 = scmp.eq.s32.totalorder %s22, 0
      %p84 = por %p82, %p83
      %s86 = sadd.s32 %s85, 1
      %p89 = scmp.eq.s32.totalorder %s16, 1
      %p90 = scmp.ne.s32.totalorder %s85, %s87
      %p91 = scmp.eq.s32.totalorder %s16, 0
      %p92 = por %p90, %p91
      %p93 = scmp.ne.s32.totalorder %s85, %s87
      %p94 = scmp.eq.s32.totalorder %s21, 1
      %p95 = por %p93, %p94
      %p96 = scmp.ne.s32.totalorder %s87, %s88
      %p97 = scmp.eq.s32.totalorder %s21, 0
      %p98 = por %p96, %p97
      %p99 = scmp.ne.s32.totalorder %s87, %s88
      %p100 = scmp.eq.s32.totalorder %s22, 1
      %p101 = por %p99, %p100
      %p103 = scmp.ne.s32.totalorder %s88, %s102
      %p104 = scmp.eq.s32.totalorder %s22, 0
      %p105 = por %p103, %p104
      %s106 = ssub.s32 %s23, %s35
      %s107 = ssub.s32 %s24, %s31
      %s108 = sor.u32 %s106, %s107
      %p109 = scmp.eq.s32.totalorder %s108, 0
      %s111 = sadd.s32 %s110, 1
      %s112 = scalar_select %p109, %s110, %s111
      %p115 = pneg %p109
      %p116 = scmp.eq.s32.totalorder %s16, 1
      %p117 = por %p115, %p116
      %p118 = scmp.ne.s32.totalorder %s110, %s113
      %p119 = scmp.eq.s32.totalorder %s16, 0
      %p120 = por %p118, %p119
      %p121 = scmp.ne.s32.totalorder %s110, %s113
      %p122 = scmp.eq.s32.totalorder %s21, 1
      %p123 = por %p121, %p122
      %p124 = scmp.ne.s32.totalorder %s113, %s114
      %p125 = scmp.eq.s32.totalorder %s21, 0
      %p126 = por %p124, %p125
      %p127 = scmp.ne.s32.totalorder %s113, %s114
      %p128 = scmp.eq.s32.totalorder %s22, 1
      %p129 = por %p127, %p128
      %p131 = scmp.ne.s32.totalorder %s114, %s130
      %p132 = scmp.eq.s32.totalorder %s22, 0
      %p133 = por %p131, %p132
      %p134 = scmp.le.s32.totalorder 1, %s16
      %p135 = scmp.lt.s32.totalorder %s16, 3
      %p136 = pnand %p134, %p135
      %p137 = pneg %p136
      // Predicated region
      $region9: #{tpu_custom_call.1} parent=5 // pred_check
        _
      $region10: #{tpu_custom_call.1} parent=5 // pred_check_branch
        %139 = sbr.rel (%p136) target = $region12
      $region11: #{tpu_custom_call.1} parent=5 // pred_region
        %s140 = ssub.s32 %s16, 1
        // Predicated region
        $region13: #{tpu_custom_call.1} parent=11 // pred_check
          %p141 = pneg %p77
        $region14: #{tpu_custom_call.1} parent=11 // pred_check_branch
          %143 = sbr.rel (%p141) target = $region16
        $region15: #{tpu_custom_call.1} parent=11 // pred_region
          %s145 = ssub.s32 6144, 6144
          %146 = vsyncadd [#allocation6], %s145
          %s147 = sshll.u32 [#allocation5], 4
          %s148 = int_to_ptr.vmem [resolvable:$true] %s147
          %153 = dma.hbm_to_vmem [thread:$0]  %s1, 6144, %s148, [#allocation6], 128, 128, 8
        $region16: #{tpu_custom_call.1} parent=11 // pred_fallthru
          _
        // Predicated region
        $region17: #{tpu_custom_call.1} parent=11 // pred_check
          %p154 = pneg %p98
        $region18: #{tpu_custom_call.1} parent=11 // pred_check_branch
          %156 = sbr.rel (%p154) target = $region20
        $region19: #{tpu_custom_call.1} parent=11 // pred_region
          _
        $region20: #{tpu_custom_call.1} parent=11 // pred_fallthru
          _
      $region12: #{tpu_custom_call.1} parent=5 // pred_fallthru
        _
      %p157 = scmp.lt.s32.totalorder %s16, 2
      // Predicated region
      $region21: #{tpu_custom_call.1} parent=5 // pred_check
        %p158 = pneg %p157
      $region22: #{tpu_custom_call.1} parent=5 // pred_check_branch
        %160 = sbr.rel (%p158) target = $region24
      $region23: #{tpu_custom_call.1} parent=5 // pred_region
        // Predicated region
        $region25: #{tpu_custom_call.1} parent=23 // pred_check
          %p161 = pneg %p50
        $region26: #{tpu_custom_call.1} parent=23 // pred_check_branch
          %163 = sbr.rel (%p161) target = $region28
        $region27: #{tpu_custom_call.1} parent=23 // pred_region
          %s164 = sand.u32 %s40, 1
          %s165 = scalar_lea.sflag [#allocation3], %s164
          %s166 = sand.u32 %s40, 1
          %s167 = smul.addr %s166, 24
          %s168 = scalar_lea.vmem [#allocation2], %s167
          %s170 = ssub.s32 384, 384
          %171 = vsyncadd %s165, %s170
          %s172 = smul.addr %s24, 3
          %s173 = smul.addr %s23, 3
          %s174 = sadd.s32 %s172, %s173
          %s175 = smul.addr %s174, 128
          %s176 = scalar_lea.hbm %s0, %s175
          %s177 = sshll.u32 %s168, 4
          %s178 = int_to_ptr.vmem [resolvable:$true] %s177
          %183 = dma.hbm_to_vmem [thread:$0]  %s176, 384, %s178, %s165, 128, 128, 8
        $region28: #{tpu_custom_call.1} parent=23 // pred_fallthru
          _
      $region24: #{tpu_custom_call.1} parent=5 // pred_fallthru
        _
      %p184 = scmp.le.s32.totalorder 1, %s16
      %p185 = scmp.lt.s32.totalorder %s16, 3
      %p186 = pnand %p184, %p185
      %p187 = pneg %p186
      // Predicated region
      $region29: #{tpu_custom_call.1} parent=5 // pred_check
        _
      $region30: #{tpu_custom_call.1} parent=5 // pred_check_branch
        %189 = sbr.rel (%p186) target = $region32
      $region31: #{tpu_custom_call.1} parent=5 // pred_region
        %s190 = ssub.s32 %s16, 1
        %s191 = sand.u32 %s43, 1
        %s192 = scalar_lea.sflag [#allocation3], %s191
        %s193 = sand.u32 %s43, 1
        %s194 = smul.addr %s193, 24
        %s195 = scalar_lea.vmem [#allocation2], %s194
        // Predicated region
        $region33: #{tpu_custom_call.1} parent=31 // pred_check
          %p196 = pneg %p56
        $region34: #{tpu_custom_call.1} parent=31 // pred_check_branch
          %198 = sbr.rel (%p196) target = $region36
        $region35: #{tpu_custom_call.1} parent=31 // pred_region
          %199 = dma.done %s192, 384
        $region36: #{tpu_custom_call.1} parent=31 // pred_fallthru
          _
        // Predicated region
        $region37: #{tpu_custom_call.1} parent=31 // pred_check
          %p200 = pneg %p77
        $region38: #{tpu_custom_call.1} parent=31 // pred_check_branch
          %202 = sbr.rel (%p200) target = $region40
        $region39: #{tpu_custom_call.1} parent=31 // pred_region
          %203 = dma.done [#allocation6], 6144
        $region40: #{tpu_custom_call.1} parent=31 // pred_fallthru
          _
        %s204 = sand.u32 %s43, 1
        %s205 = scalar_lea.sflag [#allocation3], %s204
        %s206 = sand.u32 %s43, 1
        %s207 = smul.addr %s206, 24
        %s208 = scalar_lea.vmem [#allocation2], %s207
        %p209 = pneg %p56
        %p210 = pneg %p53
        %p211 = pneg %p77
        %p212 = pneg %p74
        %p213 = pneg %p98
        %p214 = pneg %p95
        %p215 = pneg %p126
        %p216 = pneg %p123
        %s217 = sand.u32 %s113, 1
        %s218 = scalar_lea.sflag [#allocation4], %s217
        %s219 = sand.u32 %s113, 1
        %s220 = smul.addr %s219, 16
        %s221 = scalar_lea.vmem [#allocation7], %s220
        %s222 = smul.u32 2, %s26
        %v223 = vld [vmem:[%s195] sm:$0xff]
        %v224 = vld [vmem:[%s195 + $0x8] sm:$0xff]
        %v225 = vld [vmem:[%s195 + $0x10] sm:$0xff]
        %vm229 = vcmask 1046528
        %v230 = vrot.slane %v223, 1
        %v231 = vrot.slane %v224, 1
        %v232 = vsel %vm229, %v230, %v231
        %v233 = vrot.slane %v225, 1
        %v234 = vsel %vm229, %v231, %v233
        %vm237 = vcmask 1045504
        %v238 = vrot.slane %v223, 2
        %v239 = vrot.slane %v224, 2
        %v240 = vsel %vm237, %v238, %v239
        %v241 = vrot.slane %v225, 2
        %v242 = vsel %vm237, %v239, %v241
        %v245 = vld [vmem:[#allocation5] sm:$0xff]
        %v246 = vld [vmem:[#allocation5 + $0x8] sm:$0xff]
        %v247 = vld [vmem:[#allocation5 + $0x10] sm:$0xff]
        %v248 = vld [vmem:[#allocation5 + $0x18] sm:$0xff]
        %v249 = vld [vmem:[#allocation5 + $0x20] sm:$0xff]
        %v250 = vld [vmem:[#allocation5 + $0x28] sm:$0xff]
        %v251 = vld [vmem:[#allocation5 + $0x30] sm:$0xff]
        %v252 = vld [vmem:[#allocation5 + $0x38] sm:$0xff]
        %v253 = vld [vmem:[#allocation5 + $0x40] sm:$0xff]
        %v254 = vld [vmem:[#allocation5 + $0x48] sm:$0xff]
        %v255 = vld [vmem:[#allocation5 + $0x50] sm:$0xff]
        %v256 = vld [vmem:[#allocation5 + $0x58] sm:$0xff]
        %v257 = vld [vmem:[#allocation5 + $0x60] sm:$0xff]
        %v258 = vld [vmem:[#allocation5 + $0x68] sm:$0xff]
        %v259 = vld [vmem:[#allocation5 + $0x70] sm:$0xff]
        %v260 = vld [vmem:[#allocation5 + $0x78] sm:$0xff]
        %v261 = vld [vmem:[#allocation5 + $0x80] sm:$0xff]
        %v262 = vld [vmem:[#allocation5 + $0x88] sm:$0xff]
        %v263 = vld [vmem:[#allocation5 + $0x90] sm:$0xff]
        %v264 = vld [vmem:[#allocation5 + $0x98] sm:$0xff]
        %v265 = vld [vmem:[#allocation5 + $0xa0] sm:$0xff]
        %v266 = vld [vmem:[#allocation5 + $0xa8] sm:$0xff]
        %v267 = vld [vmem:[#allocation5 + $0xb0] sm:$0xff]
        %v268 = vld [vmem:[#allocation5 + $0xb8] sm:$0xff]
        %v269 = vld [vmem:[#allocation5 + $0xc0] sm:$0xff]
        %v270 = vld [vmem:[#allocation5 + $0xc8] sm:$0xff]
        %v271 = vld [vmem:[#allocation5 + $0xd0] sm:$0xff]
        %v272 = vld [vmem:[#allocation5 + $0xd8] sm:$0xff]
        %v273 = vld [vmem:[#allocation5 + $0xe0] sm:$0xff]
        %v274 = vld [vmem:[#allocation5 + $0xe8] sm:$0xff]
        %v275 = vld [vmem:[#allocation5 + $0xf0] sm:$0xff]
        %v276 = vld [vmem:[#allocation5 + $0xf8] sm:$0xff]
        %v277 = vld [vmem:[#allocation5 + $0x100] sm:$0xff]
        %v278 = vld [vmem:[#allocation5 + $0x108] sm:$0xff]
        %v279 = vld [vmem:[#allocation5 + $0x110] sm:$0xff]
        %v280 = vld [vmem:[#allocation5 + $0x118] sm:$0xff]
        %v281 = vld [vmem:[#allocation5 + $0x120] sm:$0xff]
        %v282 = vld [vmem:[#allocation5 + $0x128] sm:$0xff]
        %v283 = vld [vmem:[#allocation5 + $0x130] sm:$0xff]
        %v284 = vld [vmem:[#allocation5 + $0x138] sm:$0xff]
        %v285 = vld [vmem:[#allocation5 + $0x140] sm:$0xff]
        %v286 = vld [vmem:[#allocation5 + $0x148] sm:$0xff]
        %v287 = vld [vmem:[#allocation5 + $0x150] sm:$0xff]
        %v288 = vld [vmem:[#allocation5 + $0x158] sm:$0xff]
        %v289 = vld [vmem:[#allocation5 + $0x160] sm:$0xff]
        %v290 = vld [vmem:[#allocation5 + $0x168] sm:$0xff]
        %v291 = vld [vmem:[#allocation5 + $0x170] sm:$0xff]
        %v292 = vld [vmem:[#allocation5 + $0x178] sm:$0xff]
        %v293 = vld [vmem:[%s2] sm:$0x1]
        %v295 = vlaneseq
        %v296 = vshrl.u32 %v295, 7
        %v297 = vsub.s32 0, %v296
        %v298 = vrot.slane %v293, %v297
        %300 = vmatprep.subr.mxu0 0.0
        %301 = vmatpush1.msra.mxu0 %v260
        %302 = vmatprep.subr.mxu0 0.0
        %303 = vmatpush1.msra.mxu0 %v259
        %304 = vmatprep.subr.mxu0 0.0
        %305 = vmatpush1.msra.mxu0 %v258
        %306 = vmatprep.subr.mxu0 0.0
        %307 = vmatpush1.msra.mxu0 %v257
        %308 = vmatprep.subr.mxu0 0.0
        %309 = vmatpush1.msra.mxu0 %v256
        %310 = vmatprep.subr.mxu0 0.0
        %311 = vmatpush1.msra.mxu0 %v255
        %312 = vmatprep.subr.mxu0 0.0
        %313 = vmatpush1.msra.mxu0 %v254
        %314 = vmatprep.subr.mxu0 0.0
        %315 = vmatpush1.msra.mxu0 %v253
        %316 = vmatprep.subr.mxu0 0.0
        %317 = vmatpush1.msra.mxu0 %v252
        %318 = vmatprep.subr.mxu0 0.0
        %319 = vmatpush1.msra.mxu0 %v251
        %320 = vmatprep.subr.mxu0 0.0
        %321 = vmatpush1.msra.mxu0 %v250
        %322 = vmatprep.subr.mxu0 0.0
        %323 = vmatpush1.msra.mxu0 %v249
        %324 = vmatprep.subr.mxu0 0.0
        %325 = vmatpush1.msra.mxu0 %v248
        %326 = vmatprep.subr.mxu0 0.0
        %327 = vmatpush1.msra.mxu0 %v247
        %328 = vmatprep.subr.mxu0 0.0
        %329 = vmatpush1.msra.mxu0 %v246
        %330 = vmatprep.subr.mxu0 0.0
        %331 = vmatpush1.msra.mxu0 %v245
        %332 = vmatprep.subr.mxu0 0.0
        %333 = vmatpush2.msra.mxu0 %v276
        %334 = vmatprep.subr.mxu0 0.0
        %335 = vmatpush2.msra.mxu0 %v275
        %336 = vmatprep.subr.mxu0 0.0
        %337 = vmatpush2.msra.mxu0 %v274
        %338 = vmatprep.subr.mxu0 0.0
        %339 = vmatpush2.msra.mxu0 %v273
        %340 = vmatprep.subr.mxu0 0.0
        %341 = vmatpush2.msra.mxu0 %v272
        %342 = vmatprep.subr.mxu0 0.0
        %343 = vmatpush2.msra.mxu0 %v271
        %344 = vmatprep.subr.mxu0 0.0
        %345 = vmatpush2.msra.mxu0 %v270
        %346 = vmatprep.subr.mxu0 0.0
        %347 = vmatpush2.msra.mxu0 %v269
        %348 = vmatprep.subr.mxu0 0.0
        %349 = vmatpush2.msra.mxu0 %v268
        %350 = vmatprep.subr.mxu0 0.0
        %351 = vmatpush2.msra.mxu0 %v267
        %352 = vmatprep.subr.mxu0 0.0
        %353 = vmatpush2.msra.mxu0 %v266
        %354 = vmatprep.subr.mxu0 0.0
        %355 = vmatpush2.msra.mxu0 %v265
        %356 = vmatprep.subr.mxu0 0.0
        %357 = vmatpush2.msra.mxu0 %v264
        %358 = vmatprep.subr.mxu0 0.0
        %359 = vmatpush2.msra.mxu0 %v263
        %360 = vmatprep.subr.mxu0 0.0
        %361 = vmatpush2.msra.mxu0 %v262
        %362 = vmatprep.subr.mxu0 0.0
        %363 = vmatpush2.msra.mxu0 %v261
        %364 = vmatprep.mubr.f32.mxu0 %v232
        %365 = vmatmul.mubr.f32.gmra.mxu0 %v223
        %v366 = vpop.f32.mrf.mxu0
        %v367 = vadd.f32 %v298, %v366
        %v368 = vpop.f32.mrf.mxu0
        %369 = vmatprep.mubr.f32.mxu0 %v234
        %370 = vmatmul.mubr.f32.gmra.mxu0 %v224
        %v371 = vpop.f32.mrf.mxu0
        %v372 = vadd.f32 %v298, %v371
        %v373 = vpop.f32.mrf.mxu0
        %374 = vdwg.mxu0
        %375 = vmatprep.subr.mxu0 0.0
        %376 = vmatpush1.msra.mxu0 %v292
        %377 = vmatprep.subr.mxu0 0.0
        %378 = vmatpush1.msra.mxu0 %v291
        %379 = vmatprep.subr.mxu0 0.0
        %380 = vmatpush1.msra.mxu0 %v290
        %381 = vmatprep.subr.mxu0 0.0
        %382 = vmatpush1.msra.mxu0 %v289
        %383 = vmatprep.subr.mxu0 0.0
        %384 = vmatpush1.msra.mxu0 %v288
        %385 = vmatprep.subr.mxu0 0.0
        %386 = vmatpush1.msra.mxu0 %v287
        %387 = vmatprep.subr.mxu0 0.0
        %388 = vmatpush1.msra.mxu0 %v286
        %389 = vmatprep.subr.mxu0 0.0
        %390 = vmatpush1.msra.mxu0 %v285
        %391 = vmatprep.subr.mxu0 0.0
        %392 = vmatpush1.msra.mxu0 %v284
        %393 = vmatprep.subr.mxu0 0.0
        %394 = vmatpush1.msra.mxu0 %v283
        %395 = vmatprep.subr.mxu0 0.0
        %396 = vmatpush1.msra.mxu0 %v282
        %397 = vmatprep.subr.mxu0 0.0
        %398 = vmatpush1.msra.mxu0 %v281
        %399 = vmatprep.subr.mxu0 0.0
        %400 = vmatpush1.msra.mxu0 %v280
        %401 = vmatprep.subr.mxu0 0.0
        %402 = vmatpush1.msra.mxu0 %v279
        %403 = vmatprep.subr.mxu0 0.0
        %404 = vmatpush1.msra.mxu0 %v278
        %405 = vmatprep.subr.mxu0 0.0
        %406 = vmatpush1.msra.mxu0 %v277
        %407 = vmatprep.subr.mxu0 0.0
        %408 = vmatpush2.msra.mxu0 0.0
        %409 = vmatprep.subr.mxu0 0.0
        %410 = vmatpush2.msra.mxu0 0.0
        %411 = vmatprep.subr.mxu0 0.0
        %412 = vmatpush2.msra.mxu0 0.0
        %413 = vmatprep.subr.mxu0 0.0
        %414 = vmatpush2.msra.mxu0 0.0
        %415 = vmatprep.subr.mxu0 0.0
        %416 = vmatpush2.msra.mxu0 0.0
        %417 = vmatprep.subr.mxu0 0.0
        %418 = vmatpush2.msra.mxu0 0.0
        %419 = vmatprep.subr.mxu0 0.0
        %420 = vmatpush2.msra.mxu0 0.0
        %421 = vmatprep.subr.mxu0 0.0
        %422 = vmatpush2.msra.mxu0 0.0
        %423 = vmatprep.subr.mxu0 0.0
        %424 = vmatpush2.msra.mxu0 0.0
        %425 = vmatprep.subr.mxu0 0.0
        %426 = vmatpush2.msra.mxu0 0.0
        %427 = vmatprep.subr.mxu0 0.0
        %428 = vmatpush2.msra.mxu0 0.0
        %429 = vmatprep.subr.mxu0 0.0
        %430 = vmatpush2.msra.mxu0 0.0
        %431 = vmatprep.subr.mxu0 0.0
        %432 = vmatpush2.msra.mxu0 0.0
        %433 = vmatprep.subr.mxu0 0.0
        %434 = vmatpush2.msra.mxu0 0.0
        %435 = vmatprep.subr.mxu0 0.0
        %436 = vmatpush2.msra.mxu0 0.0
        %437 = vmatprep.subr.mxu0 0.0
        %438 = vmatpush2.msra.mxu0 0.0
        %439 = vmatprep.mubr.f32.mxu0 0.0
        %440 = vmatmul.mubr.f32.gmra.mxu0 %v240
        %v441 = vpop.f32.mrf.mxu0
        %v442 = vadd.f32 %v367, %v441
        %v443 = vpop.f32.mrf.mxu0
        %444 = vmatprep.mubr.f32.mxu0 0.0
        %445 = vmatmul.mubr.f32.gmra.mxu0 %v242
        %v446 = vpop.f32.mrf.mxu0
        %v447 = vadd.f32 %v372, %v446
        %v448 = vpop.f32.mrf.mxu0
        %449 = vdwg.mxu0
        %450 = vst [vmem:[%s221] sm:$0xff] %v442
        %451 = vst [vmem:[%s221 + $0x8] sm:$0xff] %v447
        %s452 = sand.u32 %s113, 1
        %s453 = scalar_lea.sflag [#allocation4], %s452
        %s454 = sand.u32 %s113, 1
        %s455 = smul.addr %s454, 16
        %s456 = scalar_lea.vmem [#allocation7], %s455
        // Predicated region
        $region41: #{tpu_custom_call.1} parent=31 // pred_check
          %p457 = pneg %p123
        $region42: #{tpu_custom_call.1} parent=31 // pred_check_branch
          %459 = sbr.rel (%p457) target = $region44
        $region43: #{tpu_custom_call.1} parent=31 // pred_region
          %s460 = smul.u32 2, %s26
          %s462 = ssub.s32 256, 256
          %463 = vsyncadd %s453, %s462
          %s464 = smul.addr %s25, 2
          %s465 = sadd.s32 %s460, %s464
          %s466 = smul.addr %s465, 128
          %s467 = scalar_lea.hbm %s3, %s466
          %s468 = sshll.u32 %s456, 4
          %s469 = int_to_ptr.vmem [resolvable:$true] %s468
          %474 = dma.vmem_to_hbm [thread:$0]  %s469, 256, %s467, %s453, 128, 128, 8
        $region44: #{tpu_custom_call.1} parent=31 // pred_fallthru
          _
      $region32: #{tpu_custom_call.1} parent=5 // pred_fallthru
        _
      %p475 = scmp.le.s32.totalorder 2, %s16
      // Predicated region
      $region45: #{tpu_custom_call.1} parent=5 // pred_check
        %p476 = pneg %p475
      $region46: #{tpu_custom_call.1} parent=5 // pred_check_branch
        %478 = sbr.rel (%p476) target = $region48
      $region47: #{tpu_custom_call.1} parent=5 // pred_region
        %s479 = ssub.s32 %s16, 2
        // Predicated region
        $region49: #{tpu_custom_call.1} parent=47 // pred_check
          %p480 = pneg %p129
        $region50: #{tpu_custom_call.1} parent=47 // pred_check_branch
          %482 = sbr.rel (%p480) target = $region52
        $region51: #{tpu_custom_call.1} parent=47 // pred_region
          %s483 = sand.u32 %s114, 1
          %s484 = scalar_lea.sflag [#allocation4], %s483
          %s485 = sand.u32 %s114, 1
          %s486 = smul.addr %s485, 16
          %s487 = scalar_lea.vmem [#allocation7], %s486
          %488 = dma.done %s484, 256
        $region52: #{tpu_custom_call.1} parent=47 // pred_fallthru
          _
      $region48: #{tpu_custom_call.1} parent=5 // pred_fallthru
        _
    $region6: #{tpu_custom_call.1} parent=1 // loop_footer
      %s20 = sadd.s32 1, %s16
    $region7: #{tpu_custom_call.1} parent=1 // loop_footer_branch
      %15 = sbr.rel target = $region3
    $region8: #{tpu_custom_call.1} parent=1 // loop_exit
      _
    %489 = vsyncpa [#allocation3], 1
    %s490 = scalar_lea.sflag [#allocation3], 1
    %491 = vsyncpa %s490, 1
    %492 = vsyncpa [#allocation6], 1
    %493 = vsyncpa [#allocation4], 1
    %s494 = scalar_lea.sflag [#allocation4], 1
    %495 = vsyncpa %s494, 1

</llo_original>
